<compile_context>
chip_gen: v5e
topology: v5e:2x2
jax: 0.10.0
libtpu: 0.0.40
codegen_flags: <defaults>
</compile_context>

<pallas_src>
import jax
import jax.numpy as jnp
import numpy as np
from jax.experimental import pallas as pl
from jax.experimental.pallas import tpu as pltpu


def apply_2d_rotation(x, rotation):
    """Rotate the last two (spatial) dims by 0/90/180/270 degrees (torch parity)."""
    if rotation == 0:
        return x
    elif rotation == 90:
        return jnp.flip(jnp.swapaxes(x, -2, -1), axis=-2)
    elif rotation == 180:
        return jnp.flip(jnp.flip(x, axis=-2), axis=-1)
    elif rotation == 270:
        return jnp.swapaxes(jnp.flip(x, axis=-2), -2, -1)
    else:
        raise ValueError(f"bad rotation {rotation}")


def _equiv_loss_kernel(a_ref, b_ref, out_ref):
    """Accumulate per-lane partial sums of the L2 and KL terms.

    a_ref:   (bsz, CHW)  hp, already rotated by label_rot*90 for each sample
    b_ref:   (bsz, CHW)  hp_rot target
    out_ref: (2, CHW)    f32 resident accumulator; row 0 = L2, row 1 = KL
    """
    step = pl.program_id(1)

    @pl.when(step == 0)
    def _init():
        out_ref[...] = jnp.zeros_like(out_ref)

    a = a_ref[...].astype(jnp.float32)
    b = b_ref[...].astype(jnp.float32)

    diff = a - b
    b_clamped = jnp.maximum(b, jnp.float32(1e-9))
    # Torch parity: no clamp on `a` (0 * log(0) would NaN, same as reference).
    kl = a * jnp.log(a / b_clamped)

    # Only collapse the sublane (batch) axis per step; the cheap cross-lane
    # reduction is a one-time epilogue in the wrapper.
    out_ref[0:1, :] += jnp.sum(diff * diff, axis=0, keepdims=True)
    out_ref[1:2, :] += jnp.sum(kl, axis=0, keepdims=True)


def _round_up(x, m):
    return ((x + m - 1) // m) * m


@jax.jit
def equivariance_constraint_loss(hp, hp_rot, label_rot):
    """JAX/Pallas equivalent of EquivarianceConstraintLoss.forward (mode='l2')."""
    B, C, H, W = hp.shape
    assert H == W, "90/270 degree rotations require square spatial dims"
    CHW = C * H * W

    # --- Rotation selection (layout plumbing, kept out of the kernel). -------
    # TODO(synk): rotating in-kernel (flip/transpose on the VMEM tile gated by a
    # prefetched label) would cut another ~B*C*H*W of HBM read traffic, but
    # jnp.flip / minor-dim transpose lowering of small spatial tiles in Mosaic
    # is fragile, so the selected rotation is materialized once here instead.
    lbl = label_rot.astype(jnp.int32).reshape(B, 1, 1, 1)
    hp_sel = hp
    for r in range(1, 4):
        hp_sel = jnp.where(lbl == r, apply_2d_rotation(hp, r * 90), hp_sel)

    # --- Lane-dense flattening + batch padding (keep caller dtype in HBM). ---
    a_flat = hp_sel.reshape(B, CHW)
    b_flat = hp_rot.reshape(B, CHW)

    num_cores = 2  # v7x has 2 TensorCores; harmless (sequential) on v5e/v6e.
    itemsize = jnp.dtype(hp.dtype).itemsize
    row_bytes = CHW * itemsize
    # 2 inputs x 2 pipeline buffers x bsz rows; stay well inside v7x's default
    # 32 MiB scoped VMEM.
    budget = 8 * 1024 * 1024
    bsz_cap = max(8, (budget // (4 * row_bytes)) // 8 * 8)
    bsz = min(_round_up(-(-B // num_cores), 8), bsz_cap)
    b_pad = _round_up(B, num_cores * bsz)
    steps = b_pad // (num_cores * bsz)

    if b_pad > B:
        # a=1, b=1 padding contributes exactly 0 to both loss terms.
        pad_a = jnp.ones((b_pad - B, CHW), a_flat.dtype)
        pad_b = jnp.ones((b_pad - B, CHW), b_flat.dtype)
        a_flat = jnp.concatenate([a_flat, pad_a], axis=0)
        b_flat = jnp.concatenate([b_flat, pad_b], axis=0)

    grid_spec = pltpu.PrefetchScalarGridSpec(
        num_scalar_prefetch=0,
        grid=(num_cores, steps),
        in_specs=[
            pl.BlockSpec((bsz, CHW), lambda c, i: (c * steps + i, 0)),
            pl.BlockSpec((bsz, CHW), lambda c, i: (c * steps + i, 0)),
        ],
        out_specs=pl.BlockSpec((pl.Squeezed(), 2, CHW), lambda c, i: (c, 0, 0)),
    )

    partials = pl.pallas_call(
        _equiv_loss_kernel,
        out_shape=jax.ShapeDtypeStruct((num_cores, 2, CHW), jnp.float32),
        grid_spec=grid_spec,
        compiler_params=pltpu.CompilerParams(
            dimension_semantics=("parallel", "arbitrary"),
        ),
    )(a_flat, b_flat)

    totals = partials.sum(axis=(0, 2))  # tiny epilogue reduction in XLA
    loss_l2 = totals[0] / jnp.float32(B * CHW)
    loss_kl = totals[1] / jnp.float32(B)
    return loss_kl * 0.4 + loss_l2 * 0.6


def reference_loss(hp, hp_rot, label_rot):
    """Pure-JAX reference mirroring the PyTorch forward exactly."""
    B = hp.shape[0]
    nelem = hp.size
    loss_l2 = 0.0
    loss_kl = 0.0
    for r in range(4):
        mask = (label_rot == r).astype(jnp.float32)[:, None, None, None]
        hp_r = apply_2d_rotation(hp, r * 90)
        loss_l2 += (jnp.square(hp_r - hp_rot) * mask).sum()
        loss_kl += (hp_r * jnp.log(hp_r / jnp.clip(hp_rot, 1e-9)) * mask).sum()
    loss_kl = loss_kl / B
    loss_l2 = loss_l2 / nelem
    return loss_kl * 0.4 + loss_l2 * 0.6


if __name__ == "__main__":
    key = jax.random.PRNGKey(0)
    k1, k2, k3 = jax.random.split(key, 3)

    B, C, H, W = 8, 4, 16, 16
    # Heatmaps are positive (softmax-like outputs in the original model).
    hp = jax.random.uniform(k1, (B, C, H, W), jnp.float32, minval=0.05, maxval=1.0)
    hp_rot = jax.random.uniform(k2, (B, C, H, W), jnp.float32, minval=0.05, maxval=1.0)
    label_rot = jax.random.randint(k3, (B,), 0, 4, dtype=jnp.int32)

    out = equivariance_constraint_loss(hp, hp_rot, label_rot)
    out = jax.block_until_ready(out)

    ref = reference_loss(hp, hp_rot, label_rot)
    np.testing.assert_allclose(np.asarray(out), np.asarray(ref), rtol=1e-4, atol=1e-4)

    print("KERNEL_OK")
</pallas_src>

<mosaic_0001>
module attributes {stable_mosaic.version = 11 : i64} {
  func.func @_equiv_loss_kernel(%arg0: i32, %arg1: i32, %arg2: memref<8x1024xf32, #tpu.memory_space<vmem>>, %arg3: memref<8x1024xf32, #tpu.memory_space<vmem>>, %arg4: memref<1x2x1024xf32, #tpu.memory_space<vmem>>) attributes {dimension_semantics = [#tpu.dimension_semantics<parallel>, #tpu.dimension_semantics<arbitrary>], iteration_bounds = array<i64: 2, 1>, scalar_prefetch = 0 : i64, scratch_operands = 0 : i64, tpu.core_type = #tpu.core_type<tc>, window_params = [{transform_indices = @transform_0, window_bounds = array<i64: 8, 1024>}, {transform_indices = @transform_1, window_bounds = array<i64: 8, 1024>}, {transform_indices = @transform_2, window_bounds = array<i64: 1, 2, 1024>}]} {
    %c0_i32 = arith.constant 0 : i32
    %0 = arith.cmpi eq, %arg1, %c0_i32 : i32
    %1 = arith.extui %0 : i1 to i32
    %c0_i32_0 = arith.constant 0 : i32
    %2 = arith.cmpi ne, %1, %c0_i32_0 : i32
    scf.if %2 {
      %cst_17 = arith.constant 0.000000e+00 : f32
      %28 = vector.broadcast %cst_17 : f32 to vector<2x1024xf32>
      %c0_18 = arith.constant 0 : index
      %c0_19 = arith.constant 0 : index
      %c0_20 = arith.constant 0 : index
      %29 = vector.load %arg4[%c0_18, %c0_19, %c0_20] : memref<1x2x1024xf32, #tpu.memory_space<vmem>>, vector<1x2x1024xf32>
      %30 = vector.shape_cast %29 : vector<1x2x1024xf32> to vector<2x1024xf32>
      %31 = vector.shape_cast %28 : vector<2x1024xf32> to vector<1x2x1024xf32>
      tpu.vector_store %arg4[%c0_18, %c0_19, %c0_20], %31 {strides = array<i32>} : memref<1x2x1024xf32, #tpu.memory_space<vmem>>, vector<1x2x1024xf32>,
    } else {
    }
    %c0 = arith.constant 0 : index
    %c0_1 = arith.constant 0 : index
    %3 = vector.load %arg2[%c0, %c0_1] : memref<8x1024xf32, #tpu.memory_space<vmem>>, vector<8x1024xf32>
    %c0_2 = arith.constant 0 : index
    %c0_3 = arith.constant 0 : index
    %4 = vector.load %arg3[%c0_2, %c0_3] : memref<8x1024xf32, #tpu.memory_space<vmem>>, vector<8x1024xf32>
    %5 = arith.subf %3, %4 : vector<8x1024xf32>
    %cst = arith.constant 9.99999971E-10 : f32
    %6 = vector.broadcast %cst : f32 to vector<8x1024xf32>
    %7 = arith.maximumf %4, %6 : vector<8x1024xf32>
    %8 = arith.divf %3, %7 : vector<8x1024xf32>
    %9 = math.log %8 : vector<8x1024xf32>
    %10 = arith.mulf %3, %9 : vector<8x1024xf32>
    %c0_4 = arith.constant 0 : index
    %c0_5 = arith.constant 0 : index
    %c0_6 = arith.constant 0 : index
    %11 = vector.load %arg4[%c0_4, %c0_5, %c0_6] : memref<1x2x1024xf32, #tpu.memory_space<vmem>>, vector<1x1x1024xf32>
    %12 = vector.shape_cast %11 : vector<1x1x1024xf32> to vector<1x1024xf32>
    %13 = arith.mulf %5, %5 : vector<8x1024xf32>
    %cst_7 = arith.constant dense<0.000000e+00> : vector<1024xf32>
    %14 = vector.multi_reduction <add>, %13, %cst_7 [0] : vector<8x1024xf32> to vector<1024xf32>
    %15 = vector.shape_cast %14 : vector<1024xf32> to vector<1x1024xf32>
    %16 = arith.addf %12, %15 : vector<1x1024xf32>
    %c0_8 = arith.constant 0 : index
    %c0_9 = arith.constant 0 : index
    %c0_10 = arith.constant 0 : index
    %17 = vector.load %arg4[%c0_8, %c0_9, %c0_10] : memref<1x2x1024xf32, #tpu.memory_space<vmem>>, vector<1x1x1024xf32>
    %18 = vector.shape_cast %17 : vector<1x1x1024xf32> to vector<1x1024xf32>
    %19 = vector.shape_cast %16 : vector<1x1024xf32> to vector<1x1x1024xf32>
    tpu.vector_store %arg4[%c0_8, %c0_9, %c0_10], %19 {strides = array<i32>} : memref<1x2x1024xf32, #tpu.memory_space<vmem>>, vector<1x1x1024xf32>,
    %c0_11 = arith.constant 0 : index
    %c1 = arith.constant 1 : index
    %c0_12 = arith.constant 0 : index
    %20 = vector.load %arg4[%c0_11, %c1, %c0_12] : memref<1x2x1024xf32, #tpu.memory_space<vmem>>, vector<1x1x1024xf32>
    %21 = vector.shape_cast %20 : vector<1x1x1024xf32> to vector<1x1024xf32>
    %cst_13 = arith.constant dense<0.000000e+00> : vector<1024xf32>
    %22 = vector.multi_reduction <add>, %10, %cst_13 [0] : vector<8x1024xf32> to vector<1024xf32>
    %23 = vector.shape_cast %22 : vector<1024xf32> to vector<1x1024xf32>
    %24 = arith.addf %21, %23 : vector<1x1024xf32>
    %c0_14 = arith.constant 0 : index
    %c1_15 = arith.constant 1 : index
    %c0_16 = arith.constant 0 : index
    %25 = vector.load %arg4[%c0_14, %c1_15, %c0_16] : memref<1x2x1024xf32, #tpu.memory_space<vmem>>, vector<1x1x1024xf32>
    %26 = vector.shape_cast %25 : vector<1x1x1024xf32> to vector<1x1024xf32>
    %27 = vector.shape_cast %24 : vector<1x1024xf32> to vector<1x1x1024xf32>
    tpu.vector_store %arg4[%c0_14, %c1_15, %c0_16], %27 {strides = array<i32>} : memref<1x2x1024xf32, #tpu.memory_space<vmem>>, vector<1x1x1024xf32>,
    return
  }
  func.func @transform_0(%arg0: i32, %arg1: i32) -> (i32, i32) {
    %c1_i32 = arith.constant 1 : i32
    %0 = arith.muli %arg0, %c1_i32 : i32
    %1 = arith.addi %0, %arg1 : i32
    %c0_i32 = arith.constant 0 : i32
    %c0_i32_0 = arith.constant 0 : i32
    return %1, %c0_i32 : i32, i32
  }
  func.func @transform_1(%arg0: i32, %arg1: i32) -> (i32, i32) {
    %c1_i32 = arith.constant 1 : i32
    %0 = arith.muli %arg0, %c1_i32 : i32
    %1 = arith.addi %0, %arg1 : i32
    %c0_i32 = arith.constant 0 : i32
    %c0_i32_0 = arith.constant 0 : i32
    return %1, %c0_i32 : i32, i32
  }
  func.func @transform_2(%arg0: i32, %arg1: i32) -> (i32, i32, i32) {
    %c0_i32 = arith.constant 0 : i32
    %c0_i32_0 = arith.constant 0 : i32
    %c0_i32_1 = arith.constant 0 : i32
    return %arg0, %c0_i32, %c0_i32_0 : i32, i32, i32
  }
}

</mosaic_0001>

<llo_original>
// kernel: equivariance_constraint_loss.1
$region0: #{equivariance_constraint_loss.1}
  #allocation0 [shape = 'u32[]', space=smem, size = 0x4, offset = 0x4, fixed_abs, tag = 'smem constant byte address 0x4 - core index']
  #allocation1 [shape = 'u32[72,128]{1,0:T(1,128)}', space=vmem, size = 0x9000, scoped, tag = 'internal scratch']
  %s0 = inlined_call_operand.vmem [shape: f32[16,1024], index: 0, kind: input, shape index: {}]
  %s1 = inlined_call_operand.vmem [shape: f32[16,1024], index: 1, kind: input, shape index: {}]
  %s2 = inlined_call_operand.vmem [shape: f32[2,2,1024], index: 2, kind: output, shape index: {}]
  %s3 = sld [smem:[#allocation0]]
  $region45: #{equivariance_constraint_loss.1} parent=0
    _
  %s5 = ssub.s32 1, %s3
  %s6 = scalar_select 0, %s5, %s3
  loop: start=0, step=1, limit=4
  $region2: #{equivariance_constraint_loss.1} parent=0 // loop_pre_header
    _
  $region3: #{equivariance_constraint_loss.1} parent=0 // loop_header
    %s8 = sphi 0, %s12
    %p9 = scmp.ge.s32.totalorder %s8, 4
    %s15 = sphi 0, %s27
    %s16 = sphi 0, %s23
    %s17 = sphi 0, %s15
    %s18 = sphi 0, %s16
    %s19 = sphi 0, %s17
    %s20 = sphi 0, %s18
    %s32 = sphi 0, %s34
    %s35 = sphi 0, %s32
    %s36 = sphi 0, %s35
    %s52 = sphi 0, %s36
    %s60 = sphi 0, %s62
    %s63 = sphi 0, %s60
    %s64 = sphi 0, %s63
    %s80 = sphi 0, %s64
    %s86 = sphi 0, %s88
    %s89 = sphi 0, %s86
    %s90 = sphi 0, %s89
    %s106 = sphi 0, %s90
  $region4: #{equivariance_constraint_loss.1} parent=0 // loop_header_branch
    %11 = sbr.rel (%p9) target = $region8
  $region5: #{equivariance_constraint_loss.1} parent=0 // loop_body
    %s13 = ssub.s32 %s8, 1
    %s14 = ssub.s32 %s8, 2
    %s21 = sadd.s32 1, %s16
    %p22 = scmp.ge.s32.totalorder %s21, 1
    %s23 = scalar_select %p22, 0, %s21
    %s24 = sadd.s32 1, %s15
    %s25 = scalar_select %p22, %s24, %s15
    %p26 = scmp.ge.s32.totalorder %s25, 2
    %s27 = scalar_select %p26, 0, %s25
    %s28 = sadd.s32 %s15, %s16
    %s29 = sadd.s32 %s27, %s23
    %s30 = ssub.s32 %s28, %s29
    %p31 = scmp.eq.s32.totalorder %s30, 0
    %s33 = sadd.s32 %s32, 1
    %s34 = scalar_select %p31, %s32, %s33
    %p37 = pneg %p31
    %p38 = scmp.eq.s32.totalorder %s8, 1
    %p39 = por %p37, %p38
    %p40 = scmp.ne.s32.totalorder %s32, %s35
    %p41 = scmp.eq.s32.totalorder %s8, 0
    %p42 = por %p40, %p41
    %p43 = scmp.ne.s32.totalorder %s32, %s35
    %p44 = scmp.eq.s32.totalorder %s13, 1
    %p45 = por %p43, %p44
    %p46 = scmp.ne.s32.totalorder %s35, %s36
    %p47 = scmp.eq.s32.totalorder %s13, 0
    %p48 = por %p46, %p47
    %p49 = scmp.ne.s32.totalorder %s35, %s36
    %p50 = scmp.eq.s32.totalorder %s14, 1
    %p51 = por %p49, %p50
    %p53 = scmp.ne.s32.totalorder %s36, %s52
    %p54 = scmp.eq.s32.totalorder %s14, 0
    %p55 = por %p53, %p54
    %s56 = sadd.s32 %s15, %s16
    %s57 = sadd.s32 %s27, %s23
    %s58 = ssub.s32 %s56, %s57
    %p59 = scmp.eq.s32.totalorder %s58, 0
    %s61 = sadd.s32 %s60, 1
    %s62 = scalar_select %p59, %s60, %s61
    %p65 = pneg %p59
    %p66 = scmp.eq.s32.totalorder %s8, 1
    %p67 = por %p65, %p66
    %p68 = scmp.ne.s32.totalorder %s60, %s63
    %p69 = scmp.eq.s32.totalorder %s8, 0
    %p70 = por %p68, %p69
    %p71 = scmp.ne.s32.totalorder %s60, %s63
    %p72 = scmp.eq.s32.totalorder %s13, 1
    %p73 = por %p71, %p72
    %p74 = scmp.ne.s32.totalorder %s63, %s64
    %p75 = scmp.eq.s32.totalorder %s13, 0
    %p76 = por %p74, %p75
    %p77 = scmp.ne.s32.totalorder %s63, %s64
    %p78 = scmp.eq.s32.totalorder %s14, 1
    %p79 = por %p77, %p78
    %p81 = scmp.ne.s32.totalorder %s64, %s80
    %p82 = scmp.eq.s32.totalorder %s14, 0
    %p83 = por %p81, %p82
    %s84 = ssub.s32 %s15, %s27
    %p85 = scmp.eq.s32.totalorder %s84, 0
    %s87 = sadd.s32 %s86, 1
    %s88 = scalar_select %p85, %s86, %s87
    %p91 = pneg %p85
    %p92 = scmp.eq.s32.totalorder %s8, 1
    %p93 = por %p91, %p92
    %p94 = scmp.ne.s32.totalorder %s86, %s89
    %p95 = scmp.eq.s32.totalorder %s8, 0
    %p96 = por %p94, %p95
    %p97 = scmp.ne.s32.totalorder %s86, %s89
    %p98 = scmp.eq.s32.totalorder %s13, 1
    %p99 = por %p97, %p98
    %p100 = scmp.ne.s32.totalorder %s89, %s90
    %p101 = scmp.eq.s32.totalorder %s13, 0
    %p102 = por %p100, %p101
    %p103 = scmp.ne.s32.totalorder %s89, %s90
    %p104 = scmp.eq.s32.totalorder %s14, 1
    %p105 = por %p103, %p104
    %p107 = scmp.ne.s32.totalorder %s90, %s106
    %p108 = scmp.eq.s32.totalorder %s14, 0
    %p109 = por %p107, %p108
    %p110 = scmp.le.s32.totalorder 1, %s8
    %p111 = scmp.lt.s32.totalorder %s8, 3
    %p112 = pnand %p110, %p111
    %p113 = pneg %p112
    // Predicated region
    $region9: #{equivariance_constraint_loss.1} parent=5 // pred_check
      _
    $region10: #{equivariance_constraint_loss.1} parent=5 // pred_check_branch
      %115 = sbr.rel (%p112) target = $region12
    $region11: #{equivariance_constraint_loss.1} parent=5 // pred_region
      %s116 = ssub.s32 %s8, 1
    $region12: #{equivariance_constraint_loss.1} parent=5 // pred_fallthru
      _
    %p117 = scmp.lt.s32.totalorder %s8, 2
    // Predicated region
    $region13: #{equivariance_constraint_loss.1} parent=5 // pred_check
      %p118 = pneg %p117
    $region14: #{equivariance_constraint_loss.1} parent=5 // pred_check_branch
      %120 = sbr.rel (%p118) target = $region16
    $region15: #{equivariance_constraint_loss.1} parent=5 // pred_region
      // Predicated region
      $region17: #{equivariance_constraint_loss.1} parent=15 // pred_check
        %p121 = pneg %p42
      $region18: #{equivariance_constraint_loss.1} parent=15 // pred_check_branch
        %123 = sbr.rel (%p121) target = $region20
      $region19: #{equivariance_constraint_loss.1} parent=15 // pred_region
        %s124 = sadd.s32 %s15, %s16
        %p125 = scmp.lt.s32.totalorder %s124, 1
        %s126 = scalar_select %p125, %s124, 1
        %s127 = smul.addr %s126, 8
        %s128 = smul.addr %s127, 8
        %s129 = scalar_lea.vmem %s0, %s128
        %s130 = sadd.s32 %s15, %s16
      $region20: #{equivariance_constraint_loss.1} parent=15 // pred_fallthru
        _
      // Predicated region
      $region21: #{equivariance_constraint_loss.1} parent=15 // pred_check
        %p131 = pneg %p70
      $region22: #{equivariance_constraint_loss.1} parent=15 // pred_check_branch
        %133 = sbr.rel (%p131) target = $region24
      $region23: #{equivariance_constraint_loss.1} parent=15 // pred_region
        %s134 = sadd.s32 %s15, %s16
        %p135 = scmp.lt.s32.totalorder %s134, 1
        %s136 = scalar_select %p135, %s134, 1
        %s137 = smul.addr %s136, 8
        %s138 = smul.addr %s137, 8
        %s139 = scalar_lea.vmem %s1, %s138
        %s140 = sadd.s32 %s15, %s16
      $region24: #{equivariance_constraint_loss.1} parent=15 // pred_fallthru
        _
    $region16: #{equivariance_constraint_loss.1} parent=5 // pred_fallthru
      _
    %p141 = scmp.le.s32.totalorder 1, %s8
    %p142 = scmp.lt.s32.totalorder %s8, 3
    %p143 = pnand %p141, %p142
    %p144 = pneg %p143
    // Predicated region
    $region25: #{equivariance_constraint_loss.1} parent=5 // pred_check
      _
    $region26: #{equivariance_constraint_loss.1} parent=5 // pred_check_branch
      %146 = sbr.rel (%p143) target = $region28
    $region27: #{equivariance_constraint_loss.1} parent=5 // pred_region
      %s147 = ssub.s32 %s8, 1
      %s148 = sadd.s32 %s17, %s18
      %p149 = scmp.lt.s32.totalorder %s148, 1
      %s150 = scalar_select %p149, %s148, 1
      %s151 = smul.addr %s150, 8
      %s152 = smul.addr %s151, 8
      %s153 = scalar_lea.vmem %s0, %s152
      %p154 = pneg %p48
      %p155 = pneg %p45
      %s156 = sadd.s32 %s17, %s18
      %p157 = scmp.lt.s32.totalorder %s156, 1
      %s158 = scalar_select %p157, %s156, 1
      %s159 = smul.addr %s158, 8
      %s160 = smul.addr %s159, 8
      %s161 = scalar_lea.vmem %s1, %s160
      %p162 = pneg %p76
      %p163 = pneg %p73
      %p164 = pneg %p102
      %p165 = pneg %p99
      %p166 = scmp.lt.s32.totalorder %s17, 1
      %s167 = scalar_select %p166, %s17, 1
      %s168 = smul.addr %s167, 8
      %s169 = smul.addr %s168, 2
      %s170 = scalar_lea.vmem %s2, %s169
      %s171 = sadd.s32 %s17, %s18
      %p172 = scmp.lt.s32.totalorder %s171, 1
      %s173 = scalar_select %p172, %s171, 1
      %s174 = smul.addr %s173, 8
      %s175 = smul.addr %s174, 8
      %s176 = scalar_lea.vmem %s0, %s175
      %s177 = sadd.s32 %s17, %s18
      %s178 = sadd.s32 %s17, %s18
      %p179 = scmp.lt.s32.totalorder %s178, 1
      %s180 = scalar_select %p179, %s178, 1
      %s181 = smul.addr %s180, 8
      %s182 = smul.addr %s181, 8
      %s183 = scalar_lea.vmem %s1, %s182
      %s184 = sadd.s32 %s17, %s18
      %p185 = scmp.lt.s32.totalorder %s17, 1
      %s186 = scalar_select %p185, %s17, 1
      %s187 = smul.addr %s186, 8
      %s188 = smul.addr %s187, 2
      %s189 = scalar_lea.vmem %s2, %s188
      %p190 = scmp.eq.s32.totalorder %s18, 0
      // Predicated region
      $region29: #{equivariance_constraint_loss.1} parent=27 // pred_check
        %p191 = pneg %p190
      $region30: #{equivariance_constraint_loss.1} parent=27 // pred_check_branch
        %193 = sbr.rel (%p191) target = $region32
      $region31: #{equivariance_constraint_loss.1} parent=27 // pred_region
        %194 = vst [vmem:[%s189] sm:$0xff] 0.0
        %195 = vst [vmem:[%s189 + $0x8] sm:$0xff] 0.0
      $region32: #{equivariance_constraint_loss.1} parent=27 // pred_fallthru
        _
      %v196 = vld [vmem:[%s176] sm:$0xff]
      %v197 = vld [vmem:[%s176 + $0x8] sm:$0xff]
      %v198 = vld [vmem:[%s176 + $0x10] sm:$0xff]
      %v199 = vld [vmem:[%s176 + $0x18] sm:$0xff]
      %v200 = vld [vmem:[%s176 + $0x20] sm:$0xff]
      %v201 = vld [vmem:[%s176 + $0x28] sm:$0xff]
      %v202 = vld [vmem:[%s176 + $0x30] sm:$0xff]
      %v203 = vld [vmem:[%s176 + $0x38] sm:$0xff]
      %v204 = vld [vmem:[%s183] sm:$0xff]
      %v205 = vld [vmem:[%s183 + $0x8] sm:$0xff]
      %v206 = vld [vmem:[%s183 + $0x10] sm:$0xff]
      %v207 = vld [vmem:[%s183 + $0x18] sm:$0xff]
      %v208 = vld [vmem:[%s183 + $0x20] sm:$0xff]
      %v209 = vld [vmem:[%s183 + $0x28] sm:$0xff]
      %v210 = vld [vmem:[%s183 + $0x30] sm:$0xff]
      %v211 = vld [vmem:[%s183 + $0x38] sm:$0xff]
      %v212 = vsub.f32 %v196, %v204
      %v213 = vsub.f32 %v197, %v205
      %v214 = vsub.f32 %v198, %v206
      %v215 = vsub.f32 %v199, %v207
      %v216 = vsub.f32 %v200, %v208
      %v217 = vsub.f32 %v201, %v209
      %v218 = vsub.f32 %v202, %v210
      %v219 = vsub.f32 %v203, %v211
      %v220 = vmax.f32 %v204, 1e-09
      %v221 = vmax.f32 %v205, 1e-09
      %v222 = vmax.f32 %v206, 1e-09
      %v223 = vmax.f32 %v207, 1e-09
      %v224 = vmax.f32 %v208, 1e-09
      %v225 = vmax.f32 %v209, 1e-09
      %v226 = vmax.f32 %v210, 1e-09
      %v227 = vmax.f32 %v211, 1e-09
      %v228 = vrcp.pop %v220
      %v229 = vmul.f32 %v220, %v228
      %v230 = vsub.f32 1.0, %v229
      %v231 = vmul.f32 %v228, %v230
      %v232 = vadd.f32 %v228, %v231
      %vm233 = vweird.f32 %v220
      %vm234 = vweird.f32 %v228
      %vm235 = vmor %vm233, %vm234
      %v236 = vsel %vm235, %v228, %v232
      %v237 = vand.u32 2147483647, %v220
      %vm238 = vcmp.eq.f32.partialorder %v237, 8.507059e+37
      %v239 = vand.u32 %v220, 2147483648
      %v240 = vor.u32 1.1754944e-38, %v239
      %v241 = vsel %vm238, %v240, %v236
      %v242 = vmul.f32 %v196, %v241
      %v243 = vrcp.pop %v221
      %v244 = vmul.f32 %v221, %v243
      %v245 = vsub.f32 1.0, %v244
      %v246 = vmul.f32 %v243, %v245
      %v247 = vadd.f32 %v243, %v246
      %vm248 = vweird.f32 %v221
      %vm249 = vweird.f32 %v243
      %vm250 = vmor %vm248, %vm249
      %v251 = vsel %vm250, %v243, %v247
      %v252 = vand.u32 2147483647, %v221
      %vm253 = vcmp.eq.f32.partialorder %v252, 8.507059e+37
      %v254 = vand.u32 %v221, 2147483648
      %v255 = vor.u32 1.1754944e-38, %v254
      %v256 = vsel %vm253, %v255, %v251
      %v257 = vmul.f32 %v197, %v256
      %v258 = vrcp.pop %v222
      %v259 = vmul.f32 %v222, %v258
      %v260 = vsub.f32 1.0, %v259
      %v261 = vmul.f32 %v258, %v260
      %v262 = vadd.f32 %v258, %v261
      %vm263 = vweird.f32 %v222
      %vm264 = vweird.f32 %v258
      %vm265 = vmor %vm263, %vm264
      %v266 = vsel %vm265, %v258, %v262
      %v267 = vand.u32 2147483647, %v222
      %vm268 = vcmp.eq.f32.partialorder %v267, 8.507059e+37
      %v269 = vand.u32 %v222, 2147483648
      %v270 = vor.u32 1.1754944e-38, %v269
      %v271 = vsel %vm268, %v270, %v266
      %v272 = vmul.f32 %v198, %v271
      %v273 = vrcp.pop %v223
      %v274 = vmul.f32 %v223, %v273
      %v275 = vsub.f32 1.0, %v274
      %v276 = vmul.f32 %v273, %v275
      %v277 = vadd.f32 %v273, %v276
      %vm278 = vweird.f32 %v223
      %vm279 = vweird.f32 %v273
      %vm280 = vmor %vm278, %vm279
      %v281 = vsel %vm280, %v273, %v277
      %v282 = vand.u32 2147483647, %v223
      %vm283 = vcmp.eq.f32.partialorder %v282, 8.507059e+37
      %v284 = vand.u32 %v223, 2147483648
      %v285 = vor.u32 1.1754944e-38, %v284
      %v286 = vsel %vm283, %v285, %v281
      %v287 = vmul.f32 %v199, %v286
      %v288 = vrcp.pop %v224
      %v289 = vmul.f32 %v224, %v288
      %v290 = vsub.f32 1.0, %v289
      %v291 = vmul.f32 %v288, %v290
      %v292 = vadd.f32 %v288, %v291
      %vm293 = vweird.f32 %v224
      %vm294 = vweird.f32 %v288
      %vm295 = vmor %vm293, %vm294
      %v296 = vsel %vm295, %v288, %v292
      %v297 = vand.u32 2147483647, %v224
      %vm298 = vcmp.eq.f32.partialorder %v297, 8.507059e+37
      %v299 = vand.u32 %v224, 2147483648
      %v300 = vor.u32 1.1754944e-38, %v299
      %v301 = vsel %vm298, %v300, %v296
      %v302 = vmul.f32 %v200, %v301
      %v303 = vrcp.pop %v225
      %v304 = vmul.f32 %v225, %v303
      %v305 = vsub.f32 1.0, %v304
      %v306 = vmul.f32 %v303, %v305
      %v307 = vadd.f32 %v303, %v306
      %vm308 = vweird.f32 %v225
      %vm309 = vweird.f32 %v303
      %vm310 = vmor %vm308, %vm309
      %v311 = vsel %vm310, %v303, %v307
      %v312 = vand.u32 2147483647, %v225
      %vm313 = vcmp.eq.f32.partialorder %v312, 8.507059e+37
      %v314 = vand.u32 %v225, 2147483648
      %v315 = vor.u32 1.1754944e-38, %v314
      %v316 = vsel %vm313, %v315, %v311
      %v317 = vmul.f32 %v201, %v316
      %v318 = vrcp.pop %v226
      %v319 = vmul.f32 %v226, %v318
      %v320 = vsub.f32 1.0, %v319
      %v321 = vmul.f32 %v318, %v320
      %v322 = vadd.f32 %v318, %v321
      %vm323 = vweird.f32 %v226
      %vm324 = vweird.f32 %v318
      %vm325 = vmor %vm323, %vm324
      %v326 = vsel %vm325, %v318, %v322
      %v327 = vand.u32 2147483647, %v226
      %vm328 = vcmp.eq.f32.partialorder %v327, 8.507059e+37
      %v329 = vand.u32 %v226, 2147483648
      %v330 = vor.u32 1.1754944e-38, %v329
      %v331 = vsel %vm328, %v330, %v326
      %v332 = vmul.f32 %v202, %v331
      %v333 = vrcp.pop %v227
      %v334 = vmul.f32 %v227, %v333
      %v335 = vsub.f32 1.0, %v334
      %v336 = vmul.f32 %v333, %v335
      %v337 = vadd.f32 %v333, %v336
      %vm338 = vweird.f32 %v227
      %vm339 = vweird.f32 %v333
      %vm340 = vmor %vm338, %vm339
      %v341 = vsel %vm340, %v333, %v337
      %v342 = vand.u32 2147483647, %v227
      %vm343 = vcmp.eq.f32.partialorder %v342, 8.507059e+37
      %v344 = vand.u32 %v227, 2147483648
      %v345 = vor.u32 1.1754944e-38, %v344
      %v346 = vsel %vm343, %v345, %v341
      %v347 = vmul.f32 %v203, %v346
      %v348 = vlog2.pop %v242
      %v349 = vmul.f32 %v348, 0.6931472
      %v350 = vlog2.pop %v257
      %v351 = vmul.f32 %v350, 0.6931472
      %v352 = vlog2.pop %v272
      %v353 = vmul.f32 %v352, 0.6931472
      %v354 = vlog2.pop %v287
      %v355 = vmul.f32 %v354, 0.6931472
      %v356 = vlog2.pop %v302
      %v357 = vmul.f32 %v356, 0.6931472
      %v358 = vlog2.pop %v317
      %v359 = vmul.f32 %v358, 0.6931472
      %v360 = vlog2.pop %v332
      %v361 = vmul.f32 %v360, 0.6931472
      %v362 = vlog2.pop %v347
      %v363 = vmul.f32 %v362, 0.6931472
      %v364 = vmul.f32 %v196, %v349
      %v365 = vmul.f32 %v197, %v351
      %v366 = vmul.f32 %v198, %v353
      %v367 = vmul.f32 %v199, %v355
      %v368 = vmul.f32 %v200, %v357
      %v369 = vmul.f32 %v201, %v359
      %v370 = vmul.f32 %v202, %v361
      %v371 = vmul.f32 %v203, %v363
      %v372 = vld [vmem:[%s189] ss:$2 sm:$0xff]
      %v373 = vmul.f32 %v212, %v212
      %v374 = vmul.f32 %v213, %v213
      %v375 = vmul.f32 %v214, %v214
      %v376 = vmul.f32 %v215, %v215
      %v377 = vmul.f32 %v216, %v216
      %v378 = vmul.f32 %v217, %v217
      %v379 = vmul.f32 %v218, %v218
      %v380 = vmul.f32 %v219, %v219
      %v381 = vrot.slane %v373, 4
      %v382 = vadd.f32 %v373, %v381
      %v383 = vrot.slane %v382, 2
      %v384 = vadd.f32 %v382, %v383
      %v385 = vrot.slane %v384, 1
      %v386 = vadd.f32 %v384, %v385
      %v387 = vrot.slane %v374, 4
      %v388 = vadd.f32 %v374, %v387
      %v389 = vrot.slane %v388, 2
      %v390 = vadd.f32 %v388, %v389
      %v391 = vrot.slane %v390, 1
      %v392 = vadd.f32 %v390, %v391
      %v393 = vrot.slane %v375, 4
      %v394 = vadd.f32 %v375, %v393
      %v395 = vrot.slane %v394, 2
      %v396 = vadd.f32 %v394, %v395
      %v397 = vrot.slane %v396, 1
      %v398 = vadd.f32 %v396, %v397
      %v399 = vrot.slane %v376, 4
      %v400 = vadd.f32 %v376, %v399
      %v401 = vrot.slane %v400, 2
      %v402 = vadd.f32 %v400, %v401
      %v403 = vrot.slane %v402, 1
      %v404 = vadd.f32 %v402, %v403
      %v405 = vrot.slane %v377, 4
      %v406 = vadd.f32 %v377, %v405
      %v407 = vrot.slane %v406, 2
      %v408 = vadd.f32 %v406, %v407
      %v409 = vrot.slane %v408, 1
      %v410 = vadd.f32 %v408, %v409
      %v411 = vrot.slane %v378, 4
      %v412 = vadd.f32 %v378, %v411
      %v413 = vrot.slane %v412, 2
      %v414 = vadd.f32 %v412, %v413
      %v415 = vrot.slane %v414, 1
      %v416 = vadd.f32 %v414, %v415
      %v417 = vrot.slane %v379, 4
      %v418 = vadd.f32 %v379, %v417
      %v419 = vrot.slane %v418, 2
      %v420 = vadd.f32 %v418, %v419
      %v421 = vrot.slane %v420, 1
      %v422 = vadd.f32 %v420, %v421
      %v423 = vrot.slane %v380, 4
      %v424 = vadd.f32 %v380, %v423
      %v425 = vrot.slane %v424, 2
      %v426 = vadd.f32 %v424, %v425
      %v427 = vrot.slane %v426, 1
      %v428 = vadd.f32 %v426, %v427
      %v437 = vrot.slane %v392, 7
      %v438 = vrot.slane %v398, 6
      %v439 = vrot.slane %v404, 5
      %v440 = vrot.slane %v410, 4
      %v441 = vrot.slane %v416, 3
      %v442 = vrot.slane %v422, 2
      %v443 = vrot.slane %v428, 1
      %vm444 = vcmask 1040384
      %v445 = vsel %vm444, %v386, %v437
      %vm446 = vcmask 1042434
      %v447 = vsel %vm446, %v438, %v439
      %vm448 = vcmask 1041408
      %v449 = vsel %vm448, %v445, %v447
      %vm450 = vcmask 1044484
      %v451 = vsel %vm450, %v440, %v441
      %vm452 = vcmask 1046534
      %v453 = vsel %vm452, %v442, %v443
      %vm454 = vcmask 1045508
      %v455 = vsel %vm454, %v451, %v453
      %vm456 = vcmask 1043456
      %v457 = vsel %vm456, %v449, %v455
      %v459 = vadd.f32 %v372, %v457
      %460 = vst [vmem:[%s189] ss:$2 sm:$0xff] %v459
      %s461 = scalar_lea.vmem %s189, 1
      %v462 = vld [vmem:[%s461] ss:$2 sm:$0xff]
      %v463 = vrot.slane %v364, 4
      %v464 = vadd.f32 %v364, %v463
      %v465 = vrot.slane %v464, 2
      %v466 = vadd.f32 %v464, %v465
      %v467 = vrot.slane %v466, 1
      %v468 = vadd.f32 %v466, %v467
      %v469 = vrot.slane %v365, 4
      %v470 = vadd.f32 %v365, %v469
      %v471 = vrot.slane %v470, 2
      %v472 = vadd.f32 %v470, %v471
      %v473 = vrot.slane %v472, 1
      %v474 = vadd.f32 %v472, %v473
      %v475 = vrot.slane %v366, 4
      %v476 = vadd.f32 %v366, %v475
      %v477 = vrot.slane %v476, 2
      %v478 = vadd.f32 %v476, %v477
      %v479 = vrot.slane %v478, 1
      %v480 = vadd.f32 %v478, %v479
      %v481 = vrot.slane %v367, 4
      %v482 = vadd.f32 %v367, %v481
      %v483 = vrot.slane %v482, 2
      %v484 = vadd.f32 %v482, %v483
      %v485 = vrot.slane %v484, 1
      %v486 = vadd.f32 %v484, %v485
      %v487 = vrot.slane %v368, 4
      %v488 = vadd.f32 %v368, %v487
      %v489 = vrot.slane %v488, 2
      %v490 = vadd.f32 %v488, %v489
      %v491 = vrot.slane %v490, 1
      %v492 = vadd.f32 %v490, %v491
      %v493 = vrot.slane %v369, 4
      %v494 = vadd.f32 %v369, %v493
      %v495 = vrot.slane %v494, 2
      %v496 = vadd.f32 %v494, %v495
      %v497 = vrot.slane %v496, 1
      %v498 = vadd.f32 %v496, %v497
      %v499 = vrot.slane %v370, 4
      %v500 = vadd.f32 %v370, %v499
      %v501 = vrot.slane %v500, 2
      %v502 = vadd.f32 %v500, %v501
      %v503 = vrot.slane %v502, 1
      %v504 = vadd.f32 %v502, %v503
      %v505 = vrot.slane %v371, 4
      %v506 = vadd.f32 %v371, %v505
      %v507 = vrot.slane %v506, 2
      %v508 = vadd.f32 %v506, %v507
      %v509 = vrot.slane %v508, 1
      %v510 = vadd.f32 %v508, %v509
      %v519 = vrot.slane %v474, 7
      %v520 = vrot.slane %v480, 6
      %v521 = vrot.slane %v486, 5
      %v522 = vrot.slane %v492, 4
      %v523 = vrot.slane %v498, 3
      %v524 = vrot.slane %v504, 2
      %v525 = vrot.slane %v510, 1
      %v526 = vsel %vm444, %v468, %v519
      %v527 = vsel %vm446, %v520, %v521
      %v528 = vsel %vm448, %v526, %v527
      %v529 = vsel %vm450, %v522, %v523
      %v530 = vsel %vm452, %v524, %v525
      %v531 = vsel %vm454, %v529, %v530
      %v532 = vsel %vm456, %v528, %v531
      %v534 = vadd.f32 %v462, %v532
      %535 = vst [vmem:[%s461] ss:$2 sm:$0xff] %v534
      %p536 = scmp.lt.s32.totalorder %s17, 1
      %s537 = scalar_select %p536, %s17, 1
      %s538 = smul.addr %s537, 8
      %s539 = smul.addr %s538, 2
      %s540 = scalar_lea.vmem %s2, %s539
      // Predicated region
      $region33: #{equivariance_constraint_loss.1} parent=27 // pred_check
        %p541 = pneg %p99
      $region34: #{equivariance_constraint_loss.1} parent=27 // pred_check_branch
        %543 = sbr.rel (%p541) target = $region36
      $region35: #{equivariance_constraint_loss.1} parent=27 // pred_region
        _
      $region36: #{equivariance_constraint_loss.1} parent=27 // pred_fallthru
        _
    $region28: #{equivariance_constraint_loss.1} parent=5 // pred_fallthru
      _
    %p544 = scmp.le.s32.totalorder 2, %s8
    // Predicated region
    $region37: #{equivariance_constraint_loss.1} parent=5 // pred_check
      %p545 = pneg %p544
    $region38: #{equivariance_constraint_loss.1} parent=5 // pred_check_branch
      %547 = sbr.rel (%p545) target = $region40
    $region39: #{equivariance_constraint_loss.1} parent=5 // pred_region
      %s548 = ssub.s32 %s8, 2
      // Predicated region
      $region41: #{equivariance_constraint_loss.1} parent=39 // pred_check
        %p549 = pneg %p105
      $region42: #{equivariance_constraint_loss.1} parent=39 // pred_check_branch
        %551 = sbr.rel (%p549) target = $region44
      $region43: #{equivariance_constraint_loss.1} parent=39 // pred_region
        %p552 = scmp.lt.s32.totalorder %s19, 1
        %s553 = scalar_select %p552, %s19, 1
        %s554 = smul.addr %s553, 8
        %s555 = smul.addr %s554, 2
        %s556 = scalar_lea.vmem %s2, %s555
      $region44: #{equivariance_constraint_loss.1} parent=39 // pred_fallthru
        _
    $region40: #{equivariance_constraint_loss.1} parent=5 // pred_fallthru
      _
  $region6: #{equivariance_constraint_loss.1} parent=0 // loop_footer
    %s12 = sadd.s32 1, %s8
  $region7: #{equivariance_constraint_loss.1} parent=0 // loop_footer_branch
    %7 = sbr.rel target = $region3
  $region8: #{equivariance_constraint_loss.1} parent=0 // loop_exit
    _

</llo_original>
